<compile_context>
chip_gen: v5e
topology: v5e:2x2
jax: 0.10.0
libtpu: 0.0.40
codegen_flags: <defaults>
</compile_context>

<pallas_src>
import jax
import jax.numpy as jnp
from jax.experimental import pallas as pl
from jax.experimental.pallas import tpu as pltpu


def res_block_kernel(x_ref, w1_ref, w2_ref, o_ref):
    """One batch image per grid step.

    x_ref : (H, W*C)      input rows, lane index = w*C + c.
    w1_ref: (3*W*C, W*C)  block-banded conv1 weight.
    w2_ref: (3*W*C, W*C)  block-banded conv2 weight.
    o_ref : (H, W*C)      output rows (lane-dense store).
    """
    H, WC = o_ref.shape
    x = x_ref[...]                                                # (H, WC)

    # Zero row padding built in VMEM (never materialized in HBM).
    zpad = jnp.zeros((2, WC), jnp.float32)
    a = jnp.concatenate([zpad, x, zpad], axis=0)                  # (H+4, WC)

    # ---- conv1 (+ ReLU), evaluated on H+2 output rows (rows -1 .. H) so the
    # zeroed boundary rows double as conv2's spatial row padding. ----
    p1 = jnp.concatenate([a[0:H + 2, :], a[1:H + 3, :], a[2:H + 4, :]],
                         axis=-1)                                 # (H+2, 3*WC)
    h1 = jnp.dot(p1, w1_ref[...], preferred_element_type=jnp.float32)
    h1 = jnp.maximum(h1, 0.0)                                     # act of conv_layer 0
    r = jax.lax.broadcasted_iota(jnp.int32, (H + 2, WC), 0)
    h1 = jnp.where((r >= 1) & (r <= H), h1, 0.0)                  # zero rows -1 and H

    # ---- conv2 (act=False): single banded matmul over the padded activation ----
    p2 = jnp.concatenate([h1[0:H, :], h1[1:H + 1, :], h1[2:H + 2, :]],
                         axis=-1)                                 # (H, 3*WC)
    h2 = jnp.dot(p2, w2_ref[...], preferred_element_type=jnp.float32)

    # ---- residual add ----
    o_ref[...] = h2 + x


def _band_weight(w_oihw, width):
    """Fold a 3x3 OIHW conv weight into a (3*W*Ci, W*Co) block-banded matrix.

    For each kernel row kh the (W*Ci, W*Co) block M_kh satisfies
        M_kh[w'*Ci + ci, w*Co + co] = w_oihw[co, ci, kh, w' - w + 1]  if |w'-w| <= 1
                                    = 0                               otherwise,
    so the 3x3 conv over a lane-packed row layout becomes
        out_row_h = sum_kh row_{h+kh-1} @ M_kh  =  concat_kh(rows) @ concat_kh(M_kh).
    """
    co, ci, _, _ = w_oihw.shape
    mats = []
    for kh in range(3):
        m = jnp.zeros((width * ci, width * co), jnp.float32)
        for kw in range(3):
            # [w', w] = 1 iff w' = w + (kw - 1)
            shift = jnp.eye(width, k=-(kw - 1), dtype=jnp.float32)
            blk = jnp.transpose(w_oihw[:, :, kh, kw])             # (ci, co)
            m = m + jnp.kron(shift, blk)
        mats.append(m)
    return jnp.concatenate(mats, axis=0)                          # (3*W*Ci, W*Co)


@jax.jit
def res_block_forward(x_nchw, w1_oihw, w2_oihw):
    """x_nchw: (N, C, H, W) float32 -> (N, C, H, W) float32."""
    N, C, H, W = x_nchw.shape
    WC = W * C

    # NCHW -> lane-packed rows (N, H, W*C).  Pure-JAX glue outside the kernel;
    # row padding happens inside the kernel.
    x_rows = jnp.transpose(x_nchw, (0, 2, 3, 1)).reshape(N, H, WC)

    w1b = _band_weight(w1_oihw, W)                                # (3*WC, WC)
    w2b = _band_weight(w2_oihw, W)

    out_rows = pl.pallas_call(
        res_block_kernel,
        out_shape=jax.ShapeDtypeStruct((N, H, WC), jnp.float32),
        grid=(N,),
        in_specs=[
            pl.BlockSpec((None, H, WC), lambda n: (n, 0, 0)),
            pl.BlockSpec((3 * WC, WC), lambda n: (0, 0)),
            pl.BlockSpec((3 * WC, WC), lambda n: (0, 0)),
        ],
        out_specs=pl.BlockSpec((None, H, WC), lambda n: (n, 0, 0)),
        compiler_params=pltpu.CompilerParams(
            dimension_semantics=("parallel",)),
    )(x_rows, w1b, w2b)

    return jnp.transpose(out_rows.reshape(N, H, W, C), (0, 3, 1, 2))


# ------------------------- pure-JAX reference -------------------------------
def res_block_ref(x, w1, w2):
    dn = ("NCHW", "OIHW", "NCHW")
    y = jax.lax.conv_general_dilated(x, w1, (1, 1), ((1, 1), (1, 1)),
                                     dimension_numbers=dn)
    y = jnp.maximum(y, 0.0)
    y = jax.lax.conv_general_dilated(y, w2, (1, 1), ((1, 1), (1, 1)),
                                     dimension_numbers=dn)
    return y + x


if __name__ == "__main__":
    # res_block(n_channels=8, width=0): two 3x3 convs + identity skip.
    # W * C = 16 * 8 = 128 -> fully lane-dense layout inside the kernel.
    N, C, H, W = 2, 8, 16, 16

    key = jax.random.PRNGKey(0)
    kx, kw1, kw2 = jax.random.split(key, 3)
    x = jax.random.normal(kx, (N, C, H, W), jnp.float32)
    w1 = 0.1 * jax.random.normal(kw1, (C, C, 3, 3), jnp.float32)  # layer[0].conv.weight (OIHW)
    w2 = 0.1 * jax.random.normal(kw2, (C, C, 3, 3), jnp.float32)  # layer[1].conv.weight (OIHW)

    out = jax.block_until_ready(res_block_forward(x, w1, w2))
    ref = jax.block_until_ready(res_block_ref(x, w1, w2))

    assert out.shape == (N, C, H, W)
    err = float(jnp.max(jnp.abs(out - ref)))
    assert err < 1e-4, err

    print("KERNEL_OK")
</pallas_src>

<mosaic_0001>
module attributes {stable_mosaic.version = 11 : i64} {
  func.func @res_block_kernel(%arg0: i32, %arg1: memref<1x16x128xf32, #tpu.memory_space<vmem>>, %arg2: memref<384x128xf32, #tpu.memory_space<vmem>>, %arg3: memref<384x128xf32, #tpu.memory_space<vmem>>, %arg4: memref<1x16x128xf32, #tpu.memory_space<vmem>>) attributes {dimension_semantics = [#tpu.dimension_semantics<parallel>], iteration_bounds = array<i64: 2>, scalar_prefetch = 0 : i64, scratch_operands = 0 : i64, tpu.core_type = #tpu.core_type<tc>, window_params = [{transform_indices = @transform_0, window_bounds = array<i64: 1, 16, 128>}, {pipeline_mode = #tpu.pipeline_mode<synchronous>, transform_indices = @transform_1, window_bounds = array<i64: 384, 128>}, {pipeline_mode = #tpu.pipeline_mode<synchronous>, transform_indices = @transform_2, window_bounds = array<i64: 384, 128>}, {transform_indices = @transform_3, window_bounds = array<i64: 1, 16, 128>}]} {
    %c0 = arith.constant 0 : index
    %c0_0 = arith.constant 0 : index
    %c0_1 = arith.constant 0 : index
    %0 = vector.load %arg1[%c0, %c0_0, %c0_1] : memref<1x16x128xf32, #tpu.memory_space<vmem>>, vector<1x16x128xf32>
    %1 = vector.shape_cast %0 : vector<1x16x128xf32> to vector<16x128xf32>
    %cst = arith.constant 0.000000e+00 : f32
    %2 = vector.broadcast %cst : f32 to vector<2x128xf32>
    %3 = tpu.concatenate %2, %1, %2 in 0 : vector<2x128xf32>, vector<16x128xf32>, vector<2x128xf32> -> vector<20x128xf32>
    %4 = vector.extract_strided_slice %3 {offsets = [0, 0], sizes = [18, 128], strides = [1, 1]} : vector<20x128xf32> to vector<18x128xf32>
    %5 = vector.extract_strided_slice %3 {offsets = [1, 0], sizes = [18, 128], strides = [1, 1]} : vector<20x128xf32> to vector<18x128xf32>
    %6 = vector.extract_strided_slice %3 {offsets = [2, 0], sizes = [18, 128], strides = [1, 1]} : vector<20x128xf32> to vector<18x128xf32>
    %7 = tpu.concatenate %4, %5, %6 in 1 : vector<18x128xf32>, vector<18x128xf32>, vector<18x128xf32> -> vector<18x384xf32>
    %c0_2 = arith.constant 0 : index
    %c0_3 = arith.constant 0 : index
    %8 = vector.load %arg2[%c0_2, %c0_3] : memref<384x128xf32, #tpu.memory_space<vmem>>, vector<384x128xf32>
    %cst_4 = arith.constant dense<0.000000e+00> : vector<18x128xf32>
    %9 = tpu.matmul %7, %8, %cst_4 {dimension_numbers = #tpu.dot_dimension_numbers<[1], [0], [0], [1], [0, 0, 1, 1], [], []>} : vector<18x384xf32>, vector<384x128xf32>, vector<18x128xf32> -> vector<18x128xf32>
    %cst_5 = arith.constant 0.000000e+00 : f32
    %10 = vector.broadcast %cst_5 : f32 to vector<18x128xf32>
    %11 = arith.maximumf %9, %10 : vector<18x128xf32>
    %12 = tpu.iota {dimensions = array<i32: 0>} : vector<18x128xi32>
    %c1_i32 = arith.constant 1 : i32
    %13 = vector.broadcast %c1_i32 : i32 to vector<18x128xi32>
    %14 = arith.cmpi sge, %12, %13 : vector<18x128xi32>
    %c16_i32 = arith.constant 16 : i32
    %15 = vector.broadcast %c16_i32 : i32 to vector<18x128xi32>
    %16 = arith.cmpi sle, %12, %15 : vector<18x128xi32>
    %17 = arith.andi %14, %16 : vector<18x128xi1>
    %cst_6 = arith.constant 0.000000e+00 : f32
    %18 = vector.broadcast %cst_6 : f32 to vector<18x128xf32>
    %19 = arith.select %17, %11, %18 : vector<18x128xi1>, vector<18x128xf32>
    %20 = vector.extract_strided_slice %19 {offsets = [0, 0], sizes = [16, 128], strides = [1, 1]} : vector<18x128xf32> to vector<16x128xf32>
    %21 = vector.extract_strided_slice %19 {offsets = [1, 0], sizes = [16, 128], strides = [1, 1]} : vector<18x128xf32> to vector<16x128xf32>
    %22 = vector.extract_strided_slice %19 {offsets = [2, 0], sizes = [16, 128], strides = [1, 1]} : vector<18x128xf32> to vector<16x128xf32>
    %23 = tpu.concatenate %20, %21, %22 in 1 : vector<16x128xf32>, vector<16x128xf32>, vector<16x128xf32> -> vector<16x384xf32>
    %c0_7 = arith.constant 0 : index
    %c0_8 = arith.constant 0 : index
    %24 = vector.load %arg3[%c0_7, %c0_8] : memref<384x128xf32, #tpu.memory_space<vmem>>, vector<384x128xf32>
    %cst_9 = arith.constant dense<0.000000e+00> : vector<16x128xf32>
    %25 = tpu.matmul %23, %24, %cst_9 {dimension_numbers = #tpu.dot_dimension_numbers<[1], [0], [0], [1], [0, 0, 1, 1], [], []>} : vector<16x384xf32>, vector<384x128xf32>, vector<16x128xf32> -> vector<16x128xf32>
    %26 = arith.addf %25, %1 : vector<16x128xf32>
    %c0_10 = arith.constant 0 : index
    %c0_11 = arith.constant 0 : index
    %c0_12 = arith.constant 0 : index
    %27 = vector.load %arg4[%c0_10, %c0_11, %c0_12] : memref<1x16x128xf32, #tpu.memory_space<vmem>>, vector<1x16x128xf32>
    %28 = vector.shape_cast %27 : vector<1x16x128xf32> to vector<16x128xf32>
    %29 = vector.shape_cast %26 : vector<16x128xf32> to vector<1x16x128xf32>
    tpu.vector_store %arg4[%c0_10, %c0_11, %c0_12], %29 {strides = array<i32>} : memref<1x16x128xf32, #tpu.memory_space<vmem>>, vector<1x16x128xf32>,
    return
  }
  func.func @transform_0(%arg0: i32) -> (i32, i32, i32) {
    %c0_i32 = arith.constant 0 : i32
    %c0_i32_0 = arith.constant 0 : i32
    %c0_i32_1 = arith.constant 0 : i32
    return %arg0, %c0_i32, %c0_i32_0 : i32, i32, i32
  }
  func.func @transform_1(%arg0: i32) -> (i32, i32) {
    %c0_i32 = arith.constant 0 : i32
    %c0_i32_0 = arith.constant 0 : i32
    %c0_i32_1 = arith.constant 0 : i32
    return %c0_i32, %c0_i32_0 : i32, i32
  }
  func.func @transform_2(%arg0: i32) -> (i32, i32) {
    %c0_i32 = arith.constant 0 : i32
    %c0_i32_0 = arith.constant 0 : i32
    %c0_i32_1 = arith.constant 0 : i32
    return %c0_i32, %c0_i32_0 : i32, i32
  }
  func.func @transform_3(%arg0: i32) -> (i32, i32, i32) {
    %c0_i32 = arith.constant 0 : i32
    %c0_i32_0 = arith.constant 0 : i32
    %c0_i32_1 = arith.constant 0 : i32
    return %arg0, %c0_i32, %c0_i32_0 : i32, i32, i32
  }
}

</mosaic_0001>

<llo_original>
// kernel: res_block_forward.1
$region0: #{res_block_forward.1}
  #allocation0 [shape = 'u32[]', space=smem, size = 0x4, offset = 0x4, fixed_abs, tag = 'smem constant byte address 0x4 - core index']
  #allocation1 [shape = 'u32[72,128]{1,0:T(1,128)}', space=vmem, size = 0x9000, scoped, tag = 'internal scratch']
  %s0 = inlined_call_operand.vmem [shape: f32[2,16,128], index: 0, kind: input, shape index: {}]
  %s1 = inlined_call_operand.vmem [shape: f32[384,128], index: 1, kind: input, shape index: {}]
  %s2 = inlined_call_operand.vmem [shape: f32[384,128], index: 2, kind: input, shape index: {}]
  %s3 = inlined_call_operand.vmem [shape: f32[2,16,128], index: 3, kind: output, shape index: {}]
  %s4 = sld [smem:[#allocation0]]
  $region45: #{res_block_forward.1} parent=0
    _
  %s6 = ssub.s32 1, %s4
  %s7 = scalar_select 0, %s6, %s4
  loop: start=0, step=1, limit=4
  $region2: #{res_block_forward.1} parent=0 // loop_pre_header
    _
  $region3: #{res_block_forward.1} parent=0 // loop_header
    %s9 = sphi 0, %s13
    %p10 = scmp.ge.s32.totalorder %s9, 4
    %s19 = sphi 0, %s21
    %s22 = sphi 0, %s19
    %s23 = sphi 0, %s22
    %s39 = sphi 0, %s23
    %s43 = sphi 0, %s43
    %s45 = sphi 0, %s43
    %s46 = sphi 0, %s45
    %s60 = sphi 0, %s46
    %s64 = sphi 0, %s64
    %s66 = sphi 0, %s64
    %s67 = sphi 0, %s66
    %s81 = sphi 0, %s67
    %s87 = sphi 0, %s89
    %s90 = sphi 0, %s87
    %s91 = sphi 0, %s90
    %s107 = sphi 0, %s91
  $region4: #{res_block_forward.1} parent=0 // loop_header_branch
    %12 = sbr.rel (%p10) target = $region8
  $region5: #{res_block_forward.1} parent=0 // loop_body
    %s14 = ssub.s32 %s9, 1
    %s15 = ssub.s32 %s9, 2
    %s16 = sadd.s32 %s9, 1
    %s17 = ssub.s32 %s9, %s16
    %p18 = scmp.eq.s32.totalorder %s17, 0
    %s20 = sadd.s32 %s19, 1
    %s21 = scalar_select %p18, %s19, %s20
    %p24 = pneg %p18
    %p25 = scmp.eq.s32.totalorder %s9, 1
    %p26 = por %p24, %p25
    %p27 = scmp.ne.s32.totalorder %s19, %s22
    %p28 = scmp.eq.s32.totalorder %s9, 0
    %p29 = por %p27, %p28
    %p30 = scmp.ne.s32.totalorder %s19, %s22
    %p31 = scmp.eq.s32.totalorder %s14, 1
    %p32 = por %p30, %p31
    %p33 = scmp.ne.s32.totalorder %s22, %s23
    %p34 = scmp.eq.s32.totalorder %s14, 0
    %p35 = por %p33, %p34
    %p36 = scmp.ne.s32.totalorder %s22, %s23
    %p37 = scmp.eq.s32.totalorder %s15, 1
    %p38 = por %p36, %p37
    %p40 = scmp.ne.s32.totalorder %s23, %s39
    %p41 = scmp.eq.s32.totalorder %s15, 0
    %p42 = por %p40, %p41
    %s44 = sadd.s32 %s43, 1
    %p47 = scmp.eq.s32.totalorder %s9, 1
    %p48 = scmp.ne.s32.totalorder %s43, %s45
    %p49 = scmp.eq.s32.totalorder %s9, 0
    %p50 = por %p48, %p49
    %p51 = scmp.ne.s32.totalorder %s43, %s45
    %p52 = scmp.eq.s32.totalorder %s14, 1
    %p53 = por %p51, %p52
    %p54 = scmp.ne.s32.totalorder %s45, %s46
    %p55 = scmp.eq.s32.totalorder %s14, 0
    %p56 = por %p54, %p55
    %p57 = scmp.ne.s32.totalorder %s45, %s46
    %p58 = scmp.eq.s32.totalorder %s15, 1
    %p59 = por %p57, %p58
    %p61 = scmp.ne.s32.totalorder %s46, %s60
    %p62 = scmp.eq.s32.totalorder %s15, 0
    %p63 = por %p61, %p62
    %s65 = sadd.s32 %s64, 1
    %p68 = scmp.eq.s32.totalorder %s9, 1
    %p69 = scmp.ne.s32.totalorder %s64, %s66
    %p70 = scmp.eq.s32.totalorder %s9, 0
    %p71 = por %p69, %p70
    %p72 = scmp.ne.s32.totalorder %s64, %s66
    %p73 = scmp.eq.s32.totalorder %s14, 1
    %p74 = por %p72, %p73
    %p75 = scmp.ne.s32.totalorder %s66, %s67
    %p76 = scmp.eq.s32.totalorder %s14, 0
    %p77 = por %p75, %p76
    %p78 = scmp.ne.s32.totalorder %s66, %s67
    %p79 = scmp.eq.s32.totalorder %s15, 1
    %p80 = por %p78, %p79
    %p82 = scmp.ne.s32.totalorder %s67, %s81
    %p83 = scmp.eq.s32.totalorder %s15, 0
    %p84 = por %p82, %p83
    %s85 = ssub.s32 %s9, %s16
    %p86 = scmp.eq.s32.totalorder %s85, 0
    %s88 = sadd.s32 %s87, 1
    %s89 = scalar_select %p86, %s87, %s88
    %p92 = pneg %p86
    %p93 = scmp.eq.s32.totalorder %s9, 1
    %p94 = por %p92, %p93
    %p95 = scmp.ne.s32.totalorder %s87, %s90
    %p96 = scmp.eq.s32.totalorder %s9, 0
    %p97 = por %p95, %p96
    %p98 = scmp.ne.s32.totalorder %s87, %s90
    %p99 = scmp.eq.s32.totalorder %s14, 1
    %p100 = por %p98, %p99
    %p101 = scmp.ne.s32.totalorder %s90, %s91
    %p102 = scmp.eq.s32.totalorder %s14, 0
    %p103 = por %p101, %p102
    %p104 = scmp.ne.s32.totalorder %s90, %s91
    %p105 = scmp.eq.s32.totalorder %s15, 1
    %p106 = por %p104, %p105
    %p108 = scmp.ne.s32.totalorder %s91, %s107
    %p109 = scmp.eq.s32.totalorder %s15, 0
    %p110 = por %p108, %p109
    %p111 = scmp.le.s32.totalorder 1, %s9
    %p112 = scmp.lt.s32.totalorder %s9, 3
    %p113 = pnand %p111, %p112
    %p114 = pneg %p113
    // Predicated region
    $region9: #{res_block_forward.1} parent=5 // pred_check
      _
    $region10: #{res_block_forward.1} parent=5 // pred_check_branch
      %116 = sbr.rel (%p113) target = $region12
    $region11: #{res_block_forward.1} parent=5 // pred_region
      %s117 = ssub.s32 %s9, 1
      // Predicated region
      $region13: #{res_block_forward.1} parent=11 // pred_check
        %p118 = pneg %p56
      $region14: #{res_block_forward.1} parent=11 // pred_check_branch
        %120 = sbr.rel (%p118) target = $region16
      $region15: #{res_block_forward.1} parent=11 // pred_region
        _
      $region16: #{res_block_forward.1} parent=11 // pred_fallthru
        _
      // Predicated region
      $region17: #{res_block_forward.1} parent=11 // pred_check
        %p121 = pneg %p77
      $region18: #{res_block_forward.1} parent=11 // pred_check_branch
        %123 = sbr.rel (%p121) target = $region20
      $region19: #{res_block_forward.1} parent=11 // pred_region
        _
      $region20: #{res_block_forward.1} parent=11 // pred_fallthru
        _
    $region12: #{res_block_forward.1} parent=5 // pred_fallthru
      _
    %p124 = scmp.lt.s32.totalorder %s9, 2
    // Predicated region
    $region21: #{res_block_forward.1} parent=5 // pred_check
      %p125 = pneg %p124
    $region22: #{res_block_forward.1} parent=5 // pred_check_branch
      %127 = sbr.rel (%p125) target = $region24
    $region23: #{res_block_forward.1} parent=5 // pred_region
      // Predicated region
      $region25: #{res_block_forward.1} parent=23 // pred_check
        %p128 = pneg %p29
      $region26: #{res_block_forward.1} parent=23 // pred_check_branch
        %130 = sbr.rel (%p128) target = $region28
      $region27: #{res_block_forward.1} parent=23 // pred_region
        %p131 = scmp.lt.s32.totalorder %s9, 1
        %s132 = scalar_select %p131, %s9, 1
        %s133 = smul.addr %s132, 2
        %s134 = smul.addr %s133, 8
        %s135 = scalar_lea.vmem %s0, %s134
      $region28: #{res_block_forward.1} parent=23 // pred_fallthru
        _
    $region24: #{res_block_forward.1} parent=5 // pred_fallthru
      _
    %p136 = scmp.le.s32.totalorder 1, %s9
    %p137 = scmp.lt.s32.totalorder %s9, 3
    %p138 = pnand %p136, %p137
    %p139 = pneg %p138
    // Predicated region
    $region29: #{res_block_forward.1} parent=5 // pred_check
      _
    $region30: #{res_block_forward.1} parent=5 // pred_check_branch
      %141 = sbr.rel (%p138) target = $region32
    $region31: #{res_block_forward.1} parent=5 // pred_region
      %s142 = ssub.s32 %s9, 1
      %p143 = scmp.lt.s32.totalorder %s14, 1
      %s144 = scalar_select %p143, %s14, 1
      %s145 = smul.addr %s144, 2
      %s146 = smul.addr %s145, 8
      %s147 = scalar_lea.vmem %s0, %s146
      %p148 = pneg %p35
      %p149 = pneg %p32
      %p150 = pneg %p56
      %p151 = pneg %p53
      %p152 = pneg %p77
      %p153 = pneg %p74
      %p154 = pneg %p103
      %p155 = pneg %p100
      %p156 = scmp.lt.s32.totalorder %s14, 1
      %s157 = scalar_select %p156, %s14, 1
      %s158 = smul.addr %s157, 2
      %s159 = smul.addr %s158, 8
      %s160 = scalar_lea.vmem %s3, %s159
      %p161 = scmp.lt.s32.totalorder %s14, 1
      %s162 = scalar_select %p161, %s14, 1
      %s163 = smul.addr %s162, 2
      %s164 = smul.addr %s163, 8
      %s165 = scalar_lea.vmem %s0, %s164
      %p166 = scmp.lt.s32.totalorder %s14, 1
      %s167 = scalar_select %p166, %s14, 1
      %s168 = smul.addr %s167, 2
      %s169 = smul.addr %s168, 8
      %s170 = scalar_lea.vmem %s3, %s169
      %v171 = vld [vmem:[%s165] sm:$0xff]
      %v172 = vld [vmem:[%s165 + $0x8] sm:$0xff]
      %vm175 = vcmask 1041408
      %v176 = vrot.slane %v171, 6
      %v177 = vrot.slane %v172, 6
      %v178 = vsel %vm175, %v176, %v177
      %v182 = vsel %vm175, 0.0, %v176
      %v183 = vsel %vm175, %v177, 0.0
      %vm186 = vcmask 1046528
      %v187 = vrot.slane %v182, 1
      %v188 = vrot.slane %v178, 1
      %v189 = vsel %vm186, %v187, %v188
      %v190 = vrot.slane %v183, 1
      %v191 = vsel %vm186, %v188, %v190
      %vm195 = vcmask 1045504
      %v196 = vrot.slane %v182, 2
      %v197 = vrot.slane %v178, 2
      %v198 = vsel %vm195, %v196, %v197
      %v199 = vrot.slane %v183, 2
      %v200 = vsel %vm195, %v197, %v199
      %v204 = vld [vmem:[%s1] sm:$0xff]
      %v205 = vld [vmem:[%s1 + $0x8] sm:$0xff]
      %v206 = vld [vmem:[%s1 + $0x10] sm:$0xff]
      %v207 = vld [vmem:[%s1 + $0x18] sm:$0xff]
      %v208 = vld [vmem:[%s1 + $0x20] sm:$0xff]
      %v209 = vld [vmem:[%s1 + $0x28] sm:$0xff]
      %v210 = vld [vmem:[%s1 + $0x30] sm:$0xff]
      %v211 = vld [vmem:[%s1 + $0x38] sm:$0xff]
      %v212 = vld [vmem:[%s1 + $0x40] sm:$0xff]
      %v213 = vld [vmem:[%s1 + $0x48] sm:$0xff]
      %v214 = vld [vmem:[%s1 + $0x50] sm:$0xff]
      %v215 = vld [vmem:[%s1 + $0x58] sm:$0xff]
      %v216 = vld [vmem:[%s1 + $0x60] sm:$0xff]
      %v217 = vld [vmem:[%s1 + $0x68] sm:$0xff]
      %v218 = vld [vmem:[%s1 + $0x70] sm:$0xff]
      %v219 = vld [vmem:[%s1 + $0x78] sm:$0xff]
      %v220 = vld [vmem:[%s1 + $0x80] sm:$0xff]
      %v221 = vld [vmem:[%s1 + $0x88] sm:$0xff]
      %v222 = vld [vmem:[%s1 + $0x90] sm:$0xff]
      %v223 = vld [vmem:[%s1 + $0x98] sm:$0xff]
      %v224 = vld [vmem:[%s1 + $0xa0] sm:$0xff]
      %v225 = vld [vmem:[%s1 + $0xa8] sm:$0xff]
      %v226 = vld [vmem:[%s1 + $0xb0] sm:$0xff]
      %v227 = vld [vmem:[%s1 + $0xb8] sm:$0xff]
      %v228 = vld [vmem:[%s1 + $0xc0] sm:$0xff]
      %v229 = vld [vmem:[%s1 + $0xc8] sm:$0xff]
      %v230 = vld [vmem:[%s1 + $0xd0] sm:$0xff]
      %v231 = vld [vmem:[%s1 + $0xd8] sm:$0xff]
      %v232 = vld [vmem:[%s1 + $0xe0] sm:$0xff]
      %v233 = vld [vmem:[%s1 + $0xe8] sm:$0xff]
      %v234 = vld [vmem:[%s1 + $0xf0] sm:$0xff]
      %v235 = vld [vmem:[%s1 + $0xf8] sm:$0xff]
      %v236 = vld [vmem:[%s1 + $0x100] sm:$0xff]
      %v237 = vld [vmem:[%s1 + $0x108] sm:$0xff]
      %v238 = vld [vmem:[%s1 + $0x110] sm:$0xff]
      %v239 = vld [vmem:[%s1 + $0x118] sm:$0xff]
      %v240 = vld [vmem:[%s1 + $0x120] sm:$0xff]
      %v241 = vld [vmem:[%s1 + $0x128] sm:$0xff]
      %v242 = vld [vmem:[%s1 + $0x130] sm:$0xff]
      %v243 = vld [vmem:[%s1 + $0x138] sm:$0xff]
      %v244 = vld [vmem:[%s1 + $0x140] sm:$0xff]
      %v245 = vld [vmem:[%s1 + $0x148] sm:$0xff]
      %v246 = vld [vmem:[%s1 + $0x150] sm:$0xff]
      %v247 = vld [vmem:[%s1 + $0x158] sm:$0xff]
      %v248 = vld [vmem:[%s1 + $0x160] sm:$0xff]
      %v249 = vld [vmem:[%s1 + $0x168] sm:$0xff]
      %v250 = vld [vmem:[%s1 + $0x170] sm:$0xff]
      %v251 = vld [vmem:[%s1 + $0x178] sm:$0xff]
      %252 = vmatpush.msra.mxu0 %v219
      %253 = vmatpush.msra.mxu0 %v218
      %254 = vmatpush.msra.mxu0 %v217
      %255 = vmatpush.msra.mxu0 %v216
      %256 = vmatpush.msra.mxu0 %v215
      %257 = vmatpush.msra.mxu0 %v214
      %258 = vmatpush.msra.mxu0 %v213
      %259 = vmatpush.msra.mxu0 %v212
      %260 = vmatpush.msra.mxu0 %v211
      %261 = vmatpush.msra.mxu0 %v210
      %262 = vmatpush.msra.mxu0 %v209
      %263 = vmatpush.msra.mxu0 %v208
      %264 = vmatpush.msra.mxu0 %v207
      %265 = vmatpush.msra.mxu0 %v206
      %266 = vmatpush.msra.mxu0 %v205
      %267 = vmatpush.msra.mxu0 %v204
      %268 = vmatmul.f32.gmra.mxu0 %v182
      %v269 = vpop.f32.mrf.mxu0
      %v270 = vadd.f32 0.0, %v269
      %271 = vmatmul.f32.gmra.mxu0 %v178
      %v272 = vpop.f32.mrf.mxu0
      %v273 = vadd.f32 0.0, %v272
      %274 = vmatmul.f32.gmra.mxu0 %v183
      %v275 = vpop.f32.mrf.mxu0
      %v276 = vadd.f32 0.0, %v275
      %277 = vdwg.mxu0
      %278 = vmatpush.msra.mxu0 %v235
      %279 = vmatpush.msra.mxu0 %v234
      %280 = vmatpush.msra.mxu0 %v233
      %281 = vmatpush.msra.mxu0 %v232
      %282 = vmatpush.msra.mxu0 %v231
      %283 = vmatpush.msra.mxu0 %v230
      %284 = vmatpush.msra.mxu0 %v229
      %285 = vmatpush.msra.mxu0 %v228
      %286 = vmatpush.msra.mxu0 %v227
      %287 = vmatpush.msra.mxu0 %v226
      %288 = vmatpush.msra.mxu0 %v225
      %289 = vmatpush.msra.mxu0 %v224
      %290 = vmatpush.msra.mxu0 %v223
      %291 = vmatpush.msra.mxu0 %v222
      %292 = vmatpush.msra.mxu0 %v221
      %293 = vmatpush.msra.mxu0 %v220
      %294 = vmatmul.f32.gmra.mxu0 %v189
      %v295 = vpop.f32.mrf.mxu0
      %v296 = vadd.f32 %v270, %v295
      %297 = vmatmul.f32.gmra.mxu0 %v191
      %v298 = vpop.f32.mrf.mxu0
      %v299 = vadd.f32 %v273, %v298
      %300 = vmatmul.f32.gmra.mxu0 %v190
      %v301 = vpop.f32.mrf.mxu0
      %v302 = vadd.f32 %v276, %v301
      %303 = vdwg.mxu0
      %304 = vmatpush.msra.mxu0 %v251
      %305 = vmatpush.msra.mxu0 %v250
      %306 = vmatpush.msra.mxu0 %v249
      %307 = vmatpush.msra.mxu0 %v248
      %308 = vmatpush.msra.mxu0 %v247
      %309 = vmatpush.msra.mxu0 %v246
      %310 = vmatpush.msra.mxu0 %v245
      %311 = vmatpush.msra.mxu0 %v244
      %312 = vmatpush.msra.mxu0 %v243
      %313 = vmatpush.msra.mxu0 %v242
      %314 = vmatpush.msra.mxu0 %v241
      %315 = vmatpush.msra.mxu0 %v240
      %316 = vmatpush.msra.mxu0 %v239
      %317 = vmatpush.msra.mxu0 %v238
      %318 = vmatpush.msra.mxu0 %v237
      %319 = vmatpush.msra.mxu0 %v236
      %320 = vmatmul.f32.gmra.mxu0 %v198
      %v321 = vpop.f32.mrf.mxu0
      %v322 = vadd.f32 %v296, %v321
      %323 = vmatmul.f32.gmra.mxu0 %v200
      %v324 = vpop.f32.mrf.mxu0
      %v325 = vadd.f32 %v299, %v324
      %326 = vmatmul.f32.gmra.mxu0 %v199
      %v327 = vpop.f32.mrf.mxu0
      %v328 = vadd.f32 %v302, %v327
      %329 = vdwg.mxu0
      %v330 = vmax.f32 %v322, 0.0
      %v331 = vmax.f32 %v325, 0.0
      %v332 = vmax.f32 %v328, 0.0
      %v333 = vlaneseq
      %v334 = vshrl.u32 %v333, 7
      %v335 = vadd.s32 %v334, 8
      %v336 = vadd.s32 %v334, 16
      %vm337 = vcmp.ge.s32.totalorder %v334, 1
      %vm338 = vcmp.ge.s32.totalorder %v335, 1
      %vm339 = vcmp.ge.s32.totalorder %v336, 1
      %vm340 = vcmp.le.s32.totalorder %v334, 16
      %vm341 = vcmp.le.s32.totalorder %v335, 16
      %vm342 = vcmp.le.s32.totalorder %v336, 16
      %vm343 = vmand %vm337, %vm340
      %vm344 = vmand %vm338, %vm341
      %vm345 = vmand %vm339, %vm342
      %v346 = vsel %vm343, %v330, 0.0
      %v347 = vsel %vm344, %v331, 0.0
      %v348 = vsel %vm345, %v332, 0.0
      %v352 = vrot.slane %v346, 1
      %v353 = vrot.slane %v347, 1
      %v354 = vsel %vm186, %v352, %v353
      %v355 = vrot.slane %v348, 1
      %v356 = vsel %vm186, %v353, %v355
      %v359 = vrot.slane %v346, 2
      %v360 = vrot.slane %v347, 2
      %v361 = vsel %vm195, %v359, %v360
      %v362 = vrot.slane %v348, 2
      %v363 = vsel %vm195, %v360, %v362
      %v366 = vld [vmem:[%s2] sm:$0xff]
      %v367 = vld [vmem:[%s2 + $0x8] sm:$0xff]
      %v368 = vld [vmem:[%s2 + $0x10] sm:$0xff]
      %v369 = vld [vmem:[%s2 + $0x18] sm:$0xff]
      %v370 = vld [vmem:[%s2 + $0x20] sm:$0xff]
      %v371 = vld [vmem:[%s2 + $0x28] sm:$0xff]
      %v372 = vld [vmem:[%s2 + $0x30] sm:$0xff]
      %v373 = vld [vmem:[%s2 + $0x38] sm:$0xff]
      %v374 = vld [vmem:[%s2 + $0x40] sm:$0xff]
      %v375 = vld [vmem:[%s2 + $0x48] sm:$0xff]
      %v376 = vld [vmem:[%s2 + $0x50] sm:$0xff]
      %v377 = vld [vmem:[%s2 + $0x58] sm:$0xff]
      %v378 = vld [vmem:[%s2 + $0x60] sm:$0xff]
      %v379 = vld [vmem:[%s2 + $0x68] sm:$0xff]
      %v380 = vld [vmem:[%s2 + $0x70] sm:$0xff]
      %v381 = vld [vmem:[%s2 + $0x78] sm:$0xff]
      %v382 = vld [vmem:[%s2 + $0x80] sm:$0xff]
      %v383 = vld [vmem:[%s2 + $0x88] sm:$0xff]
      %v384 = vld [vmem:[%s2 + $0x90] sm:$0xff]
      %v385 = vld [vmem:[%s2 + $0x98] sm:$0xff]
      %v386 = vld [vmem:[%s2 + $0xa0] sm:$0xff]
      %v387 = vld [vmem:[%s2 + $0xa8] sm:$0xff]
      %v388 = vld [vmem:[%s2 + $0xb0] sm:$0xff]
      %v389 = vld [vmem:[%s2 + $0xb8] sm:$0xff]
      %v390 = vld [vmem:[%s2 + $0xc0] sm:$0xff]
      %v391 = vld [vmem:[%s2 + $0xc8] sm:$0xff]
      %v392 = vld [vmem:[%s2 + $0xd0] sm:$0xff]
      %v393 = vld [vmem:[%s2 + $0xd8] sm:$0xff]
      %v394 = vld [vmem:[%s2 + $0xe0] sm:$0xff]
      %v395 = vld [vmem:[%s2 + $0xe8] sm:$0xff]
      %v396 = vld [vmem:[%s2 + $0xf0] sm:$0xff]
      %v397 = vld [vmem:[%s2 + $0xf8] sm:$0xff]
      %v398 = vld [vmem:[%s2 + $0x100] sm:$0xff]
      %v399 = vld [vmem:[%s2 + $0x108] sm:$0xff]
      %v400 = vld [vmem:[%s2 + $0x110] sm:$0xff]
      %v401 = vld [vmem:[%s2 + $0x118] sm:$0xff]
      %v402 = vld [vmem:[%s2 + $0x120] sm:$0xff]
      %v403 = vld [vmem:[%s2 + $0x128] sm:$0xff]
      %v404 = vld [vmem:[%s2 + $0x130] sm:$0xff]
      %v405 = vld [vmem:[%s2 + $0x138] sm:$0xff]
      %v406 = vld [vmem:[%s2 + $0x140] sm:$0xff]
      %v407 = vld [vmem:[%s2 + $0x148] sm:$0xff]
      %v408 = vld [vmem:[%s2 + $0x150] sm:$0xff]
      %v409 = vld [vmem:[%s2 + $0x158] sm:$0xff]
      %v410 = vld [vmem:[%s2 + $0x160] sm:$0xff]
      %v411 = vld [vmem:[%s2 + $0x168] sm:$0xff]
      %v412 = vld [vmem:[%s2 + $0x170] sm:$0xff]
      %v413 = vld [vmem:[%s2 + $0x178] sm:$0xff]
      %414 = vmatpush.msra.mxu0 %v381
      %415 = vmatpush.msra.mxu0 %v380
      %416 = vmatpush.msra.mxu0 %v379
      %417 = vmatpush.msra.mxu0 %v378
      %418 = vmatpush.msra.mxu0 %v377
      %419 = vmatpush.msra.mxu0 %v376
      %420 = vmatpush.msra.mxu0 %v375
      %421 = vmatpush.msra.mxu0 %v374
      %422 = vmatpush.msra.mxu0 %v373
      %423 = vmatpush.msra.mxu0 %v372
      %424 = vmatpush.msra.mxu0 %v371
      %425 = vmatpush.msra.mxu0 %v370
      %426 = vmatpush.msra.mxu0 %v369
      %427 = vmatpush.msra.mxu0 %v368
      %428 = vmatpush.msra.mxu0 %v367
      %429 = vmatpush.msra.mxu0 %v366
      %430 = vmatmul.f32.gmra.mxu0 %v346
      %v431 = vpop.f32.mrf.mxu0
      %v432 = vadd.f32 %v171, %v431
      %433 = vmatmul.f32.gmra.mxu0 %v347
      %v434 = vpop.f32.mrf.mxu0
      %v435 = vadd.f32 %v172, %v434
      %436 = vdwg.mxu0
      %437 = vmatpush.msra.mxu0 %v397
      %438 = vmatpush.msra.mxu0 %v396
      %439 = vmatpush.msra.mxu0 %v395
      %440 = vmatpush.msra.mxu0 %v394
      %441 = vmatpush.msra.mxu0 %v393
      %442 = vmatpush.msra.mxu0 %v392
      %443 = vmatpush.msra.mxu0 %v391
      %444 = vmatpush.msra.mxu0 %v390
      %445 = vmatpush.msra.mxu0 %v389
      %446 = vmatpush.msra.mxu0 %v388
      %447 = vmatpush.msra.mxu0 %v387
      %448 = vmatpush.msra.mxu0 %v386
      %449 = vmatpush.msra.mxu0 %v385
      %450 = vmatpush.msra.mxu0 %v384
      %451 = vmatpush.msra.mxu0 %v383
      %452 = vmatpush.msra.mxu0 %v382
      %453 = vmatmul.f32.gmra.mxu0 %v354
      %v454 = vpop.f32.mrf.mxu0
      %v455 = vadd.f32 %v432, %v454
      %456 = vmatmul.f32.gmra.mxu0 %v356
      %v457 = vpop.f32.mrf.mxu0
      %v458 = vadd.f32 %v435, %v457
      %459 = vdwg.mxu0
      %460 = vmatpush.msra.mxu0 %v413
      %461 = vmatpush.msra.mxu0 %v412
      %462 = vmatpush.msra.mxu0 %v411
      %463 = vmatpush.msra.mxu0 %v410
      %464 = vmatpush.msra.mxu0 %v409
      %465 = vmatpush.msra.mxu0 %v408
      %466 = vmatpush.msra.mxu0 %v407
      %467 = vmatpush.msra.mxu0 %v406
      %468 = vmatpush.msra.mxu0 %v405
      %469 = vmatpush.msra.mxu0 %v404
      %470 = vmatpush.msra.mxu0 %v403
      %471 = vmatpush.msra.mxu0 %v402
      %472 = vmatpush.msra.mxu0 %v401
      %473 = vmatpush.msra.mxu0 %v400
      %474 = vmatpush.msra.mxu0 %v399
      %475 = vmatpush.msra.mxu0 %v398
      %476 = vmatmul.f32.gmra.mxu0 %v361
      %v477 = vpop.f32.mrf.mxu0
      %v478 = vadd.f32 %v455, %v477
      %479 = vmatmul.f32.gmra.mxu0 %v363
      %v480 = vpop.f32.mrf.mxu0
      %v481 = vadd.f32 %v458, %v480
      %482 = vdwg.mxu0
      %483 = vst [vmem:[%s170] sm:$0xff] %v478
      %484 = vst [vmem:[%s170 + $0x8] sm:$0xff] %v481
      %p485 = scmp.lt.s32.totalorder %s14, 1
      %s486 = scalar_select %p485, %s14, 1
      %s487 = smul.addr %s486, 2
      %s488 = smul.addr %s487, 8
      %s489 = scalar_lea.vmem %s3, %s488
      // Predicated region
      $region33: #{res_block_forward.1} parent=31 // pred_check
        %p490 = pneg %p100
      $region34: #{res_block_forward.1} parent=31 // pred_check_branch
        %492 = sbr.rel (%p490) target = $region36
      $region35: #{res_block_forward.1} parent=31 // pred_region
        _
      $region36: #{res_block_forward.1} parent=31 // pred_fallthru
        _
    $region32: #{res_block_forward.1} parent=5 // pred_fallthru
      _
    %p493 = scmp.le.s32.totalorder 2, %s9
    // Predicated region
    $region37: #{res_block_forward.1} parent=5 // pred_check
      %p494 = pneg %p493
    $region38: #{res_block_forward.1} parent=5 // pred_check_branch
      %496 = sbr.rel (%p494) target = $region40
    $region39: #{res_block_forward.1} parent=5 // pred_region
      %s497 = ssub.s32 %s9, 2
      // Predicated region
      $region41: #{res_block_forward.1} parent=39 // pred_check
        %p498 = pneg %p106
      $region42: #{res_block_forward.1} parent=39 // pred_check_branch
        %500 = sbr.rel (%p498) target = $region44
      $region43: #{res_block_forward.1} parent=39 // pred_region
        %p501 = scmp.lt.s32.totalorder %s15, 1
        %s502 = scalar_select %p501, %s15, 1
        %s503 = smul.addr %s502, 2
        %s504 = smul.addr %s503, 8
        %s505 = scalar_lea.vmem %s3, %s504
      $region44: #{res_block_forward.1} parent=39 // pred_fallthru
        _
    $region40: #{res_block_forward.1} parent=5 // pred_fallthru
      _
  $region6: #{res_block_forward.1} parent=0 // loop_footer
    %s13 = sadd.s32 1, %s9
  $region7: #{res_block_forward.1} parent=0 // loop_footer_branch
    %8 = sbr.rel target = $region3
  $region8: #{res_block_forward.1} parent=0 // loop_exit
    _

</llo_original>
